<compile_context>
chip_gen: v5e
topology: v5e:2x2
jax: 0.10.0
libtpu: 0.0.40
codegen_flags: <defaults>
</compile_context>

<pallas_src>
import functools

import jax
import jax.numpy as jnp
from jax.experimental import pallas as pl
from jax.experimental.pallas import tpu as pltpu

_LANE = 128
_SUBLANE = 8


def _round_up(x: int, m: int) -> int:
    return ((x + m - 1) // m) * m


def _vmem_budget_bytes():
    """(tile_footprint_budget, vmem_limit_bytes) with generous headroom.

    Uses the physical VMEM of the attached chip when queryable; falls back to
    the smallest target (v7x: 64 MiB per TensorCore) so a v6e-tuned plan can
    never overflow a v7x core.
    """
    phys = 64 * 1024 * 1024
    try:
        info = pltpu.get_tpu_info()
        phys = getattr(info, "vmem_capacity_bytes", None) or phys
    except Exception:
        pass
    tile_budget = int(phys * 0.45)   # double-buffered tiles + scratch
    vmem_limit = int(phys * 0.70)    # compiler scoped-VMEM limit (headroom kept)
    return tile_budget, vmem_limit


def _pick_tile(dim: int, candidates, max_waste: float = 0.07):
    """Largest candidate tile with small padding waste, else minimal padded size."""
    best = None
    for c in sorted(set(int(c) for c in candidates), reverse=True):
        padded = _round_up(dim, c)
        if (padded - dim) / dim <= max_waste:
            return c, padded
        if best is None or padded < best[1]:
            best = (c, padded)
    return best


# --------------------------------------------------------------------------
# Kernels
# --------------------------------------------------------------------------
def _fc_kernel_single_k(x_ref, w_ref, b_ref, o_ref, *, relu: bool):
    # Whole K in one tile: no accumulator, no phase branches.
    # x_ref: (tm, kp)  w_ref: (kp, tn)  b_ref: (1, tn) f32  o_ref: (tm, tn)
    y = jnp.dot(x_ref[...].astype(w_ref.dtype), w_ref[...],
                preferred_element_type=jnp.float32)
    y = y + b_ref[...]
    if relu:
        y = jnp.maximum(y, 0.0)
    o_ref[...] = y.astype(o_ref.dtype)


def _fc_kernel_acc(x_ref, w_ref, b_ref, o_ref, acc_ref, *, relu: bool):
    # K-tiled path: f32 VMEM accumulator persists across the (innermost) K axis.
    k = pl.program_id(2)

    @pl.when(k == 0)
    def _():
        acc_ref[...] = jnp.zeros_like(acc_ref)

    acc_ref[...] += jnp.dot(x_ref[...].astype(w_ref.dtype), w_ref[...],
                            preferred_element_type=jnp.float32)

    @pl.when(k == pl.num_programs(2) - 1)
    def _():
        y = acc_ref[...] + b_ref[...]      # bias applied exactly once
        if relu:
            y = jnp.maximum(y, 0.0)
        o_ref[...] = y.astype(o_ref.dtype)


# --------------------------------------------------------------------------
# One-time parameter preparation (cache the result with the layer's params)
# --------------------------------------------------------------------------
def prepare_fc_params(weight: jax.Array, bias: jax.Array, *,
                      compute_dtype=None, max_tk: int | None = None):
    """Transpose + pad the torch-layout weight ONCE, pick N/K tiles.

    weight: (out_features, in_features), bias: (out_features,)
    compute_dtype: set to jnp.bfloat16 on v6e/v7x (bf16-native MXU, halves the
      dominant weight HBM stream) -- results then diverge from an f32 torch
      reference beyond ~1e-5. Default keeps the weight's own dtype.
    max_tk: optional cap on the K tile (testing / tuning hook).
    """
    out_features, in_features = weight.shape
    if compute_dtype is None:
        compute_dtype = weight.dtype
    w_bytes = jnp.dtype(compute_dtype).itemsize

    tile_budget, vmem_limit = _vmem_budget_bytes()

    # N (out_features) tile: lane axis of the output, large for weight streaming.
    tn, np_ = _pick_tile(out_features, (512, 256, 128))

    # K (in_features) tile: as large as the weight-stream budget allows;
    # "full K" is a candidate so small/medium layers skip K tiling entirely.
    w_budget = tile_budget // 3                       # double-buffered weight share
    tk_cap = max(_LANE, (w_budget // (2 * tn * w_bytes)) // _LANE * _LANE)
    if max_tk is not None:
        tk_cap = max(_LANE, min(tk_cap, max_tk))
    kp_full = _round_up(in_features, _LANE)
    k_cands = [c for c in (kp_full, 2048, 1024, 512, 256, 128) if c <= tk_cap]
    if not k_cands:
        k_cands = [_LANE]
    tk, kp = _pick_tile(in_features, k_cands)

    w_p = jnp.pad(weight.T.astype(compute_dtype),
                  ((0, kp - in_features), (0, np_ - out_features)))
    b_p = jnp.pad(bias.astype(jnp.float32),
                  (0, np_ - out_features)).reshape(1, np_)

    return {
        "w": w_p, "b": b_p,
        "in_features": in_features, "out_features": out_features,
        "tn": tn, "np": np_, "tk": tk, "kp": kp,
        "tile_budget": tile_budget, "vmem_limit": vmem_limit,
    }


# --------------------------------------------------------------------------
# Forward pass
# --------------------------------------------------------------------------
def fc_block(x: jax.Array, params: dict, relu: bool = True) -> jax.Array:
    """Pallas equivalent of FCBlock.forward using cached prepared params."""
    batch, in_features = x.shape
    assert in_features == params["in_features"]
    out_features = params["out_features"]
    tn, np_, tk, kp = params["tn"], params["np"], params["tk"], params["kp"]
    tile_budget, vmem_limit = params["tile_budget"], params["vmem_limit"]
    w_p, b_p = params["w"], params["b"]

    k_tiles = kp // tk
    n_tiles = np_ // tn
    single_k = k_tiles == 1

    # --- M tile: cover the whole padded batch in one tile when VMEM permits,
    #     so the weight is streamed from HBM exactly once per call. ---
    x_bytes = jnp.dtype(x.dtype).itemsize
    out_bytes = x_bytes
    w_tile_bytes = 2 * tk * tn * w_p.dtype.itemsize + 2 * tn * 4   # weight + bias, dbl-buffered
    per_row = 2 * tk * x_bytes + 2 * tn * out_bytes                # x + out, dbl-buffered
    if not single_k:
        per_row += tn * 4                                          # f32 accumulator scratch
    avail = max(tile_budget - w_tile_bytes, _SUBLANE * per_row)
    tm_cap = max(_SUBLANE, (avail // per_row) // _SUBLANE * _SUBLANE)
    tm = min(_round_up(batch, _SUBLANE), tm_cap, 2048)
    mp = _round_up(batch, tm)
    m_tiles = mp // tm

    # Only K padding is needed for correctness (zeros contribute nothing);
    # M/N padding is minimized by the tile choices and sliced off below.
    x_p = jnp.pad(x, ((0, mp - batch), (0, kp - in_features)))

    if single_k:
        # N outer, M inner: the weight tile's block index is constant across the
        # inner M sweep -> Pallas keeps it resident (no re-DMA); on v7x the
        # megacore split lands on N, keeping total weight HBM traffic at 1x.
        kernel = functools.partial(_fc_kernel_single_k, relu=relu)
        grid_spec = pltpu.PrefetchScalarGridSpec(
            num_scalar_prefetch=0,
            grid=(n_tiles, m_tiles),
            in_specs=[
                pl.BlockSpec((tm, tk), lambda j, i: (i, 0)),   # activations
                pl.BlockSpec((tk, tn), lambda j, i: (0, j)),   # weight (held across M)
                pl.BlockSpec((1, tn), lambda j, i: (0, j)),    # bias per-N tile
            ],
            out_specs=pl.BlockSpec((tm, tn), lambda j, i: (i, j)),
        )
        dims = ("parallel", "parallel")
    else:
        kernel = functools.partial(_fc_kernel_acc, relu=relu)
        grid_spec = pltpu.PrefetchScalarGridSpec(
            num_scalar_prefetch=0,
            grid=(m_tiles, n_tiles, k_tiles),
            in_specs=[
                pl.BlockSpec((tm, tk), lambda i, j, k: (i, k)),   # activations
                pl.BlockSpec((tk, tn), lambda i, j, k: (k, j)),   # weight
                pl.BlockSpec((1, tn), lambda i, j, k: (0, j)),    # bias per-N tile
            ],
            out_specs=pl.BlockSpec((tm, tn), lambda i, j, k: (i, j)),
            scratch_shapes=[pltpu.VMEM((tm, tn), jnp.float32)],
        )
        dims = ("parallel", "parallel", "arbitrary")

    out_p = pl.pallas_call(
        kernel,
        out_shape=jax.ShapeDtypeStruct((mp, np_), x.dtype),
        grid_spec=grid_spec,
        compiler_params=pltpu.CompilerParams(
            dimension_semantics=dims,
            vmem_limit_bytes=vmem_limit,
        ),
    )(x_p, w_p, b_p)

    return out_p[:batch, :out_features]


def init_fc_params(key, in_features: int, out_features: int, dtype=jnp.float32):
    """Deterministic init matching torch.nn.Linear default (uniform +/- 1/sqrt(in))."""
    kw, kb = jax.random.split(key)
    bound = 1.0 / jnp.sqrt(jnp.asarray(in_features, dtype))
    weight = jax.random.uniform(kw, (out_features, in_features), dtype, -bound, bound)
    bias = jax.random.uniform(kb, (out_features,), dtype, -bound, bound)
    return weight, bias


if __name__ == "__main__":
    key = jax.random.PRNGKey(0)
    kx, kp_, kx2, kp2 = jax.random.split(key, 4)

    # --- small shapes, single-K fast path (grid over N only, M grid = 1) ---
    batch, in_features, out_features = 8, 32, 64
    x = jax.random.normal(kx, (batch, in_features), jnp.float32)
    weight, bias = init_fc_params(kp_, in_features, out_features)

    params = prepare_fc_params(weight, bias)          # one-time layout prep (cached)

    y = jax.block_until_ready(fc_block(x, params, relu=True))
    y_ref = jnp.maximum(x @ weight.T + bias, 0.0)
    assert y.shape == (batch, out_features)
    assert jnp.allclose(y, y_ref, atol=1e-5, rtol=1e-5)

    y2 = jax.block_until_ready(fc_block(x, params, relu=False))
    assert jnp.allclose(y2, x @ weight.T + bias, atol=1e-5, rtol=1e-5)

    # --- exercise the K-tiled accumulator path (cap tk so K splits into 2 tiles) ---
    b2, in2, out2 = 16, 256, 128
    x2 = jax.random.normal(kx2, (b2, in2), jnp.float32)
    w2, bias2 = init_fc_params(kp2, in2, out2)
    params2 = prepare_fc_params(w2, bias2, max_tk=128)
    y3 = jax.block_until_ready(fc_block(x2, params2, relu=True))
    y3_ref = jnp.maximum(x2 @ w2.T + bias2, 0.0)
    assert jnp.allclose(y3, y3_ref, atol=1e-5, rtol=1e-5)

    print("KERNEL_OK")
</pallas_src>

<mosaic_0001>
module attributes {stable_mosaic.version = 11 : i64} {
  func.func @_fc_kernel_single_k(%arg0: i32, %arg1: i32, %arg2: memref<8x128xf32, #tpu.memory_space<vmem>>, %arg3: memref<128x128xf32, #tpu.memory_space<vmem>>, %arg4: memref<1x128xf32, #tpu.memory_space<vmem>>, %arg5: memref<8x128xf32, #tpu.memory_space<vmem>>) attributes {dimension_semantics = [#tpu.dimension_semantics<parallel>, #tpu.dimension_semantics<parallel>], iteration_bounds = array<i64: 1, 1>, scalar_prefetch = 0 : i64, scratch_operands = 0 : i64, tpu.core_type = #tpu.core_type<tc>, window_params = [{transform_indices = @transform_0, window_bounds = array<i64: 8, 128>}, {transform_indices = @transform_1, window_bounds = array<i64: 128, 128>}, {transform_indices = @transform_2, window_bounds = array<i64: 1, 128>}, {transform_indices = @transform_3, window_bounds = array<i64: 8, 128>}]} {
    %c0 = arith.constant 0 : index
    %c0_0 = arith.constant 0 : index
    %0 = vector.load %arg2[%c0, %c0_0] : memref<8x128xf32, #tpu.memory_space<vmem>>, vector<8x128xf32>
    %c0_1 = arith.constant 0 : index
    %c0_2 = arith.constant 0 : index
    %1 = vector.load %arg3[%c0_1, %c0_2] : memref<128x128xf32, #tpu.memory_space<vmem>>, vector<128x128xf32>
    %cst = arith.constant dense<0.000000e+00> : vector<8x128xf32>
    %2 = tpu.matmul %0, %1, %cst {dimension_numbers = #tpu.dot_dimension_numbers<[1], [0], [0], [1], [0, 0, 1, 1], [], []>} : vector<8x128xf32>, vector<128x128xf32>, vector<8x128xf32> -> vector<8x128xf32>
    %c0_3 = arith.constant 0 : index
    %c0_4 = arith.constant 0 : index
    %3 = vector.load %arg4[%c0_3, %c0_4] : memref<1x128xf32, #tpu.memory_space<vmem>>, vector<1x128xf32>
    %4 = vector.broadcast %3 : vector<1x128xf32> to vector<8x128xf32>
    %5 = arith.addf %2, %4 : vector<8x128xf32>
    %cst_5 = arith.constant 0.000000e+00 : f32
    %6 = vector.broadcast %cst_5 : f32 to vector<8x128xf32>
    %7 = arith.maximumf %5, %6 : vector<8x128xf32>
    %c0_6 = arith.constant 0 : index
    %c0_7 = arith.constant 0 : index
    %8 = vector.load %arg5[%c0_6, %c0_7] : memref<8x128xf32, #tpu.memory_space<vmem>>, vector<8x128xf32>
    tpu.vector_store %arg5[%c0_6, %c0_7], %7 {strides = array<i32>} : memref<8x128xf32, #tpu.memory_space<vmem>>, vector<8x128xf32>,
    return
  }
  func.func @transform_0(%arg0: i32, %arg1: i32) -> (i32, i32) {
    %c0_i32 = arith.constant 0 : i32
    %c0_i32_0 = arith.constant 0 : i32
    return %arg1, %c0_i32 : i32, i32
  }
  func.func @transform_1(%arg0: i32, %arg1: i32) -> (i32, i32) {
    %c0_i32 = arith.constant 0 : i32
    %c0_i32_0 = arith.constant 0 : i32
    return %c0_i32, %arg0 : i32, i32
  }
  func.func @transform_2(%arg0: i32, %arg1: i32) -> (i32, i32) {
    %c0_i32 = arith.constant 0 : i32
    %c0_i32_0 = arith.constant 0 : i32
    return %c0_i32, %arg0 : i32, i32
  }
  func.func @transform_3(%arg0: i32, %arg1: i32) -> (i32, i32) {
    %c0_i32 = arith.constant 0 : i32
    return %arg1, %arg0 : i32, i32
  }
}

</mosaic_0001>

<llo_original>
// kernel: tpu_custom_call.1
$region0: #{tpu_custom_call.1}
  #allocation0 [shape = 'u32[]', space=smem, size = 0x4, offset = 0x4, fixed_abs, tag = 'smem constant byte address 0x4 - core index']
  #allocation1 [shape = 'u32[72,128]{1,0:T(1,128)}', space=vmem, size = 0x9000, scoped, tag = 'internal scratch']
  %s0 = inlined_call_operand.hbm [shape: f32[8,128], index: 0, kind: input, shape index: {}]
  %s1 = inlined_call_operand.hbm [shape: f32[128,128], index: 1, kind: input, shape index: {}]
  %s2 = inlined_call_operand.vmem [shape: f32[1,128], index: 2, kind: input, shape index: {}]
  %s3 = inlined_call_operand.hbm [shape: f32[8,128], index: 3, kind: output, shape index: {}]
  %s4 = sld [smem:[#allocation0]]
  $region30: #{tpu_custom_call.1} parent=0
    _
  %s6 = ssub.s32 1, %s4
  %s7 = scalar_select 0, %s6, %s4
  $region1: #{tpu_custom_call.1} parent=0
    #allocation2 [shape = 'u8[4096]{0}', space=vmem, size = 0x1000, scoped, tag = 'input window, operand 0, single buffered']
    #allocation3 [shape = 's32[1]{0}', space=sflag, size = 0x4, scoped, tag = 'scoped memory for tpu_custom_call.1']
    #allocation4 [shape = 's32[1]{0}', space=sflag, size = 0x4, scoped, tag = 'scoped memory for tpu_custom_call.1']
    #allocation5 [shape = 'u8[65536]{0}', space=vmem, size = 0x10000, scoped, tag = 'input window, operand 1, single buffered']
    #allocation6 [shape = 's32[1]{0}', space=sflag, size = 0x4, scoped, tag = 'scoped memory for tpu_custom_call.1']
    #allocation7 [shape = 'u8[4096]{0}', space=vmem, size = 0x1000, scoped, tag = 'output window, operand 0, single buffered']
    %8 = vsyncpa [#allocation3], 0
    %9 = vsyncpa [#allocation6], 0
    %10 = vsyncpa [#allocation4], 0
    // Predicated region
    $region2: #{tpu_custom_call.1} parent=1 // pred_check
      _
    $region3: #{tpu_custom_call.1} parent=1 // pred_check_branch
      %12 = sbr.rel (0) target = $region5
    $region4: #{tpu_custom_call.1} parent=1 // pred_region
      %14 = vsyncadd [#allocation3], 0
      %s16 = sshll.u32 %s0, 4
      %s17 = int_to_ptr.hbm [resolvable:$true] %s16
      %s18 = sshll.u32 [#allocation2], 4
      %s19 = int_to_ptr.vmem [resolvable:$true] %s18
      %21 = dma.hbm_to_vmem [thread:$0]  %s17, 128, %s19, [#allocation3]
    $region5: #{tpu_custom_call.1} parent=1 // pred_fallthru
      _
    // Predicated region
    $region6: #{tpu_custom_call.1} parent=1 // pred_check
      _
    $region7: #{tpu_custom_call.1} parent=1 // pred_check_branch
      %23 = sbr.rel (0) target = $region9
    $region8: #{tpu_custom_call.1} parent=1 // pred_region
      %25 = vsyncadd [#allocation6], 0
      %s26 = sshll.u32 %s1, 4
      %s27 = int_to_ptr.hbm [resolvable:$true] %s26
      %s28 = sshll.u32 [#allocation5], 4
      %s29 = int_to_ptr.vmem [resolvable:$true] %s28
      %34 = dma.hbm_to_vmem [thread:$0]  %s27, 2048, %s29, [#allocation6], 128, 128, 8
    $region9: #{tpu_custom_call.1} parent=1 // pred_fallthru
      _
    // Predicated region
    $region10: #{tpu_custom_call.1} parent=1 // pred_check
      _
    $region11: #{tpu_custom_call.1} parent=1 // pred_check_branch
      %36 = sbr.rel (0) target = $region13
    $region12: #{tpu_custom_call.1} parent=1 // pred_region
      _
    $region13: #{tpu_custom_call.1} parent=1 // pred_fallthru
      _
    // Predicated region
    $region14: #{tpu_custom_call.1} parent=1 // pred_check
      _
    $region15: #{tpu_custom_call.1} parent=1 // pred_check_branch
      %38 = sbr.rel (0) target = $region17
    $region16: #{tpu_custom_call.1} parent=1 // pred_region
      %40 = dma.done [#allocation3], 128
    $region17: #{tpu_custom_call.1} parent=1 // pred_fallthru
      _
    // Predicated region
    $region18: #{tpu_custom_call.1} parent=1 // pred_check
      _
    $region19: #{tpu_custom_call.1} parent=1 // pred_check_branch
      %42 = sbr.rel (0) target = $region21
    $region20: #{tpu_custom_call.1} parent=1 // pred_region
      %44 = dma.done [#allocation6], 2048
    $region21: #{tpu_custom_call.1} parent=1 // pred_fallthru
      _
    %v45 = vld [vmem:[#allocation2] sm:$0xff]
    %v46 = vld [vmem:[#allocation5] sm:$0xff]
    %v47 = vld [vmem:[#allocation5 + $0x8] sm:$0xff]
    %v48 = vld [vmem:[#allocation5 + $0x10] sm:$0xff]
    %v49 = vld [vmem:[#allocation5 + $0x18] sm:$0xff]
    %v50 = vld [vmem:[#allocation5 + $0x20] sm:$0xff]
    %v51 = vld [vmem:[#allocation5 + $0x28] sm:$0xff]
    %v52 = vld [vmem:[#allocation5 + $0x30] sm:$0xff]
    %v53 = vld [vmem:[#allocation5 + $0x38] sm:$0xff]
    %v54 = vld [vmem:[#allocation5 + $0x40] sm:$0xff]
    %v55 = vld [vmem:[#allocation5 + $0x48] sm:$0xff]
    %v56 = vld [vmem:[#allocation5 + $0x50] sm:$0xff]
    %v57 = vld [vmem:[#allocation5 + $0x58] sm:$0xff]
    %v58 = vld [vmem:[#allocation5 + $0x60] sm:$0xff]
    %v59 = vld [vmem:[#allocation5 + $0x68] sm:$0xff]
    %v60 = vld [vmem:[#allocation5 + $0x70] sm:$0xff]
    %v61 = vld [vmem:[#allocation5 + $0x78] sm:$0xff]
    %v62 = vld [vmem:[%s2] sm:$0x1]
    %v64 = vperm.slane %v62, 0
    %66 = vmatpush.msra.mxu0 %v61
    %67 = vmatpush.msra.mxu0 %v60
    %68 = vmatpush.msra.mxu0 %v59
    %69 = vmatpush.msra.mxu0 %v58
    %70 = vmatpush.msra.mxu0 %v57
    %71 = vmatpush.msra.mxu0 %v56
    %72 = vmatpush.msra.mxu0 %v55
    %73 = vmatpush.msra.mxu0 %v54
    %74 = vmatpush.msra.mxu0 %v53
    %75 = vmatpush.msra.mxu0 %v52
    %76 = vmatpush.msra.mxu0 %v51
    %77 = vmatpush.msra.mxu0 %v50
    %78 = vmatpush.msra.mxu0 %v49
    %79 = vmatpush.msra.mxu0 %v48
    %80 = vmatpush.msra.mxu0 %v47
    %81 = vmatpush.msra.mxu0 %v46
    %82 = vmatmul.f32.gmra.mxu0 %v45
    %v83 = vpop.f32.mrf.mxu0
    %v84 = vadd.f32 %v64, %v83
    %85 = vdwg.mxu0
    %v86 = vmax.f32 %v84, 0.0
    %87 = vst [vmem:[#allocation7] sm:$0xff] %v86
    // Predicated region
    $region22: #{tpu_custom_call.1} parent=1 // pred_check
      _
    $region23: #{tpu_custom_call.1} parent=1 // pred_check_branch
      %89 = sbr.rel (0) target = $region25
    $region24: #{tpu_custom_call.1} parent=1 // pred_region
      %91 = vsyncadd [#allocation4], 0
      %s93 = sshll.u32 [#allocation7], 4
      %s94 = int_to_ptr.vmem [resolvable:$true] %s93
      %s95 = sshll.u32 %s3, 4
      %s96 = int_to_ptr.hbm [resolvable:$true] %s95
      %98 = dma.vmem_to_hbm [thread:$0]  %s94, 128, %s96, [#allocation4]
    $region25: #{tpu_custom_call.1} parent=1 // pred_fallthru
      _
    // Predicated region
    $region26: #{tpu_custom_call.1} parent=1 // pred_check
      _
    $region27: #{tpu_custom_call.1} parent=1 // pred_check_branch
      %100 = sbr.rel (0) target = $region29
    $region28: #{tpu_custom_call.1} parent=1 // pred_region
      %102 = dma.done [#allocation4], 128
    $region29: #{tpu_custom_call.1} parent=1 // pred_fallthru
      _
    %103 = vsyncpa [#allocation3], 1
    %104 = vsyncpa [#allocation6], 1
    %105 = vsyncpa [#allocation4], 1

</llo_original>
